<compile_context>
chip_gen: v7x
topology: tpu7x:2x2x1
jax: 0.10.0
libtpu: 0.0.40
codegen_flags: <defaults>
</compile_context>

<pallas_src>
import math
from functools import partial

import jax
import jax.numpy as jnp
from jax.experimental import pallas as pl
from jax.experimental.pallas import tpu as pltpu

EPS_LN = 1e-5
EPS_BN = 1e-5


def _sigmoid(x):
    # sigmoid(x) = 0.5*(tanh(0.5x)+1): a single EUP transcendental instead of
    # the exp + divide lowering. Identical math, cheaper on v5e.
    return 0.5 * (jnp.tanh(0.5 * x) + 1.0)


# --------------------------------------------------------------------------
# Kernel
# --------------------------------------------------------------------------
def conv_module_kernel(x_ref, ln_g_ref, ln_b_ref, w1_ref, dw_ref, bn_b_ref,
                       w2_ref, o_ref, *, seq_len):
    rows, d = x_ref.shape

    # --- LayerNorm over channels (f32 math regardless of I/O dtype) ---
    x = x_ref[...].astype(jnp.float32)
    mu = jnp.mean(x, axis=-1, keepdims=True)
    xc = x - mu
    var = jnp.mean(xc * xc, axis=-1, keepdims=True)
    x_ln = xc * jax.lax.rsqrt(var + EPS_LN)
    x_ln = x_ln * ln_g_ref[...] + ln_b_ref[...]

    # --- pointwise conv1 (1x1, D -> 2D) fused into ONE matmul, then GLU ---
    # bf16 operands, f32 accumulation on the MXU.
    y = jnp.dot(x_ln.astype(jnp.bfloat16), w1_ref[...],
                preferred_element_type=jnp.float32)            # (rows, 2D) f32
    a = y[:, :d]                                               # value half
    b = y[:, d:]                                               # gate half
    g = a * _sigmoid(b)                                        # GLU (f32)

    # --- depthwise conv (k=3, pad=1, groups=D); BN scale already folded in ---
    # Rolls are sublane rotations (XLU). Boundary handling: rows pulled across
    # a batch/sequence boundary by a roll are exactly the zero-padded
    # positions, masked with an in-kernel iota % L compare (no mask inputs).
    pos = jax.lax.broadcasted_iota(jnp.int32, (rows, 1), 0) % seq_len
    g_prev = jnp.where(pos != 0,
                       pltpu.roll(g, shift=1, axis=0), 0.0)           # g[l-1]
    g_next = jnp.where(pos != seq_len - 1,
                       pltpu.roll(g, shift=rows - 1, axis=0), 0.0)    # g[l+1]
    dw = dw_ref[...]                                           # (3, D) f32
    dwc = g_prev * dw[0:1, :] + g * dw[1:2, :] + g_next * dw[2:3, :]

    # --- BatchNorm1d (eval mode): scale folded into dw taps, add bias ---
    bn = dwc + bn_b_ref[...]

    # --- swish (f32) ---
    sw = bn * _sigmoid(bn)

    # --- pointwise conv2 (1x1, D -> D), bf16 matmul, f32 accumulation ---
    out = jnp.dot(sw.astype(jnp.bfloat16), w2_ref[...],
                  preferred_element_type=jnp.float32)

    # Dropout is identity in the deterministic (eval-mode) forward pass.
    o_ref[...] = out.astype(o_ref.dtype)


# --------------------------------------------------------------------------
# Sizing helpers
# --------------------------------------------------------------------------
def _vmem_budgets():
    """(vmem_limit_bytes, activation_budget_bytes) per TPU generation."""
    cap = 64 * 1024 * 1024
    try:
        info = pltpu.get_tpu_info()
        cap = int(getattr(info, "vmem_capacity_bytes", cap))
    except Exception:
        pass
    if cap >= 100 * 1024 * 1024:                 # v5e / v6e: 128 MiB physical
        return 96 * 1024 * 1024, 56 * 1024 * 1024
    return 40 * 1024 * 1024, 20 * 1024 * 1024    # v7x: 64 MiB physical


def _pick_block_b(B, L, D, act_budget_bytes):
    """Batch elements folded into one grid step (matmul M = block_b * L)."""
    # Conservative per-row VMEM coefficient: f32 (R,2D) GLU tensor, roll
    # temporaries, bf16 matmul copies, double-buffered f32 in/out tiles.
    bytes_per_row = 26 * D * 4
    max_rows = max(L, act_budget_bytes // bytes_per_row)
    # Sublane alignment: block rows (bb*L) must be a multiple of 8 unless the
    # block covers the full array.
    align = 8 // math.gcd(L, 8)
    divisors = [d for d in range(1, B + 1) if B % d == 0]
    fits = [d for d in divisors
            if (d % align == 0 or d == B) and d * L <= max_rows]
    if not fits:
        # Nothing aligned fits the soft budget: smallest aligned divisor
        # (vmem_limit_bytes still bounds the compile; never jump to bb = B).
        aligned = [d for d in divisors if d % align == 0 or d == B]
        return min(aligned)
    multi = [d for d in fits if B // d >= 2]            # keep both v7x TCs busy
    even = [d for d in multi if (B // d) % 2 == 0]      # balanced across 2 TCs
    pool = even or multi or fits
    return max(pool)                                    # biggest tile that fits


# --------------------------------------------------------------------------
# Buffered(1) feature detection (single-buffer constant operands)
# --------------------------------------------------------------------------
_BUFFERED_SINGLE = None


def _probe_kernel(x_ref, o_ref):
    o_ref[...] = x_ref[...]


def _buffered_single_ok():
    """True iff pipeline_mode=pl.Buffered(1) compiles on this JAX build."""
    global _BUFFERED_SINGLE
    if _BUFFERED_SINGLE is not None:
        return _BUFFERED_SINGLE
    try:
        out = pl.pallas_call(
            _probe_kernel,
            out_shape=jax.ShapeDtypeStruct((16, 128), jnp.float32),
            grid_spec=pltpu.PrefetchScalarGridSpec(
                num_scalar_prefetch=0, grid=(2,),
                in_specs=[pl.BlockSpec((8, 128), lambda i: (0, 0),
                                       pipeline_mode=pl.Buffered(1))],
                out_specs=pl.BlockSpec((8, 128), lambda i: (i, 0))),
        )(jnp.zeros((8, 128), jnp.float32))
        jax.block_until_ready(out)
        _BUFFERED_SINGLE = True
    except Exception:
        _BUFFERED_SINGLE = False
    return _BUFFERED_SINGLE


# --------------------------------------------------------------------------
# Forward wrapper
# --------------------------------------------------------------------------
def conv_module_forward(x, params, *, io_dtype=None):
    """x: (B, L, D) -> (B, L, D). Eval-mode (deterministic) forward.

    io_dtype: optional dtype for the HBM activation I/O (e.g. jnp.bfloat16 on
    memory-bound v5e/v6e shapes). Defaults to x.dtype; all element-wise math
    inside the kernel stays f32 either way.
    """
    B, L, D = x.shape
    ln_g, ln_b, w1, dw, bn_mean, bn_var, bn_g, bn_b, w2 = params

    # ---- parameter preprocessing (outside the kernel, done once) ----
    ln_g2 = ln_g.reshape(1, D).astype(jnp.float32)
    ln_b2 = ln_b.reshape(1, D).astype(jnp.float32)
    # pos_conv1 (2D, D) -> fused (D_in, 2D_out) bf16 weight (GLU halves concat).
    w1_f = jnp.transpose(w1).astype(jnp.bfloat16)              # (D, 2D)
    # pointwise_conv2 (D, D) -> (D_in, D_out) bf16.
    w2_f = jnp.transpose(w2).astype(jnp.bfloat16)              # (D, D)
    # Fold eval-mode BatchNorm: scale into the depthwise taps, bias separate.
    bn_scale = bn_g * jax.lax.rsqrt(bn_var + EPS_BN)           # (D,)
    bn_bias = (bn_b - bn_mean * bn_scale).reshape(1, D).astype(jnp.float32)
    # depthwise weight (D, 3) -> (3, D): rows = taps for offsets -1, 0, +1.
    dw_f = (jnp.transpose(dw) * bn_scale).astype(jnp.float32)  # (3, D)

    # ---- tiling: collapse block_b batches into the matmul M dimension ----
    vmem_limit, act_budget = _vmem_budgets()
    bb = _pick_block_b(B, L, D, act_budget)
    R = bb * L
    grid = (B // bb,)

    io_dt = x.dtype if io_dtype is None else jnp.dtype(io_dtype)
    x2d = x.reshape(B * L, D).astype(io_dt)

    single = _buffered_single_ok()

    def const_spec(shape):
        # Constant-index operand: never re-fetched across grid steps, so a
        # single VMEM buffer suffices (reclaims the duplicate double buffer).
        n = len(shape)

        def idx(i):
            return (0,) * n

        if single:
            return pl.BlockSpec(shape, idx, pipeline_mode=pl.Buffered(1))
        return pl.BlockSpec(shape, idx)

    row_spec = pl.BlockSpec((R, D), lambda i: (i, 0))
    in_specs = [
        row_spec,                    # x rows (block_b*L, D)
        const_spec((1, D)),          # LayerNorm gamma
        const_spec((1, D)),          # LayerNorm beta
        const_spec((D, 2 * D)),      # fused pos_conv1 weight (bf16)
        const_spec((3, D)),          # depthwise taps * bn_scale
        const_spec((1, D)),          # folded BN bias
        const_spec((D, D)),          # pointwise_conv2 weight (bf16)
    ]

    # Advisory cost hint for XLA scheduling around the custom call.
    itemsize = jnp.dtype(io_dt).itemsize
    cost = pl.CostEstimate(
        flops=6 * B * L * D * D + 16 * B * L * D,
        transcendentals=2 * B * L * D,
        bytes_accessed=(2 * B * L * D * itemsize            # activations in/out
                        + (2 * D * D + D * D) * 2           # bf16 weights
                        + (3 * D + 3 * D) * 4),             # taps + vectors
    )

    out2d = pl.pallas_call(
        partial(conv_module_kernel, seq_len=L),
        out_shape=jax.ShapeDtypeStruct((B * L, D), io_dt),
        grid_spec=pltpu.PrefetchScalarGridSpec(
            num_scalar_prefetch=0,
            grid=grid,
            in_specs=in_specs,
            out_specs=row_spec,
        ),
        compiler_params=pltpu.CompilerParams(
            dimension_semantics=("parallel",),
            vmem_limit_bytes=vmem_limit,
        ),
        cost_estimate=cost,
    )(x2d, ln_g2, ln_b2, w1_f, dw_f, bn_bias, w2_f)

    # NOTE: production D should be a multiple of 128 so the GLU split and the
    # output stores are lane-aligned (full-width vst, no masked partials).
    return out2d.reshape(B, L, D)


# --------------------------------------------------------------------------
# Pure-JAX reference (eval-mode PyTorch semantics) + synthetic params
# --------------------------------------------------------------------------
def conv_module_reference(x, params):
    ln_g, ln_b, w1, dw, bn_mean, bn_var, bn_g, bn_b, w2 = params
    D = x.shape[-1]
    mu = jnp.mean(x, -1, keepdims=True)
    var = jnp.mean((x - mu) ** 2, -1, keepdims=True)
    h = (x - mu) * jax.lax.rsqrt(var + EPS_LN) * ln_g + ln_b        # LayerNorm
    y = jnp.einsum("bld,od->blo", h, w1)                            # pos_conv1
    g = y[..., :D] * jax.nn.sigmoid(y[..., D:])                     # GLU
    gp = jnp.pad(g, ((0, 0), (1, 1), (0, 0)))                       # pad=1
    dwc = (gp[:, :-2] * dw[:, 0] + gp[:, 1:-1] * dw[:, 1]
           + gp[:, 2:] * dw[:, 2])                                  # depthwise
    bn = (dwc - bn_mean) * jax.lax.rsqrt(bn_var + EPS_BN) * bn_g + bn_b
    sw = bn * jax.nn.sigmoid(bn)                                    # swish
    return jnp.einsum("bld,od->blo", sw, w2)                        # pw_conv2


def init_params(key, D, kernel_size=3):
    """Deterministic synthetic parameters in the PyTorch module's shapes."""
    ks = jax.random.split(key, 8)
    ln_g = (1.0 + 0.1 * jax.random.normal(ks[0], (D,))).astype(jnp.float32)
    ln_b = (0.1 * jax.random.normal(ks[1], (D,))).astype(jnp.float32)
    w1 = (0.1 * jax.random.normal(ks[2], (2 * D, D))).astype(jnp.float32)
    dw = (0.1 * jax.random.normal(ks[3], (D, kernel_size))).astype(jnp.float32)
    bn_mean = (0.05 * jax.random.normal(ks[4], (D,))).astype(jnp.float32)
    bn_var = (1.0 + 0.2 * jax.random.uniform(ks[5], (D,))).astype(jnp.float32)
    bn_g = (1.0 + 0.1 * jax.random.normal(ks[6], (D,))).astype(jnp.float32)
    bn_b = jnp.zeros((D,), jnp.float32)
    w2 = (0.1 * jax.random.normal(ks[7], (D, D))).astype(jnp.float32)
    return (ln_g, ln_b, w1, dw, bn_mean, bn_var, bn_g, bn_b, w2)


if __name__ == "__main__":
    B, L, D = 2, 16, 32  # batch, sequence length, channels
    key = jax.random.PRNGKey(0)
    kx, kp = jax.random.split(key)
    x = jax.random.normal(kx, (B, L, D), dtype=jnp.float32)
    params = init_params(kp, D)

    out = conv_module_forward(x, params)
    jax.block_until_ready(out)
    assert out.shape == (B, L, D)

    # Loose tolerance: kernel uses bf16 MXU operands with f32 accumulation.
    ref = conv_module_reference(x, params)
    max_err = float(jnp.max(jnp.abs(out - ref)))
    assert max_err < 2e-2, f"max abs err {max_err}"

    print("KERNEL_OK")
</pallas_src>

<mosaic_0001>
module attributes {stable_mosaic.version = 11 : i64} {
  func.func @_probe_kernel(%arg0: i32, %arg1: memref<8x128xf32, #tpu.memory_space<vmem>>, %arg2: memref<8x128xf32, #tpu.memory_space<vmem>>) attributes {dimension_semantics = [#tpu.dimension_semantics<arbitrary>], iteration_bounds = array<i64: 2>, scalar_prefetch = 0 : i64, scratch_operands = 0 : i64, tpu.core_type = #tpu.core_type<tc>, window_params = [{pipeline_mode = #tpu.pipeline_mode<synchronous>, transform_indices = @transform_0, window_bounds = array<i64: 8, 128>}, {transform_indices = @transform_1, window_bounds = array<i64: 8, 128>}]} {
    %c0 = arith.constant 0 : index
    %c0_0 = arith.constant 0 : index
    %0 = vector.load %arg1[%c0, %c0_0] : memref<8x128xf32, #tpu.memory_space<vmem>>, vector<8x128xf32>
    %c0_1 = arith.constant 0 : index
    %c0_2 = arith.constant 0 : index
    %1 = vector.load %arg2[%c0_1, %c0_2] : memref<8x128xf32, #tpu.memory_space<vmem>>, vector<8x128xf32>
    tpu.vector_store %arg2[%c0_1, %c0_2], %0 {strides = array<i32>} : memref<8x128xf32, #tpu.memory_space<vmem>>, vector<8x128xf32>,
    return
  }
  func.func @transform_0(%arg0: i32) -> (i32, i32) {
    %c0_i32 = arith.constant 0 : i32
    %c0_i32_0 = arith.constant 0 : i32
    %c0_i32_1 = arith.constant 0 : i32
    return %c0_i32, %c0_i32_0 : i32, i32
  }
  func.func @transform_1(%arg0: i32) -> (i32, i32) {
    %c0_i32 = arith.constant 0 : i32
    %c0_i32_0 = arith.constant 0 : i32
    return %arg0, %c0_i32 : i32, i32
  }
}

module attributes {stable_mosaic.version = 11 : i64} {
  func.func @conv_module_kernel(%arg0: i32, %arg1: memref<16x32xf32, #tpu.memory_space<vmem>>, %arg2: memref<1x32xf32, #tpu.memory_space<vmem>>, %arg3: memref<1x32xf32, #tpu.memory_space<vmem>>, %arg4: memref<32x64xbf16, #tpu.memory_space<vmem>>, %arg5: memref<3x32xf32, #tpu.memory_space<vmem>>, %arg6: memref<1x32xf32, #tpu.memory_space<vmem>>, %arg7: memref<32x32xbf16, #tpu.memory_space<vmem>>, %arg8: memref<16x32xf32, #tpu.memory_space<vmem>>) attributes {dimension_semantics = [#tpu.dimension_semantics<parallel>], iteration_bounds = array<i64: 2>, scalar_prefetch = 0 : i64, scratch_operands = 0 : i64, tpu.core_type = #tpu.core_type<tc>, window_params = [{transform_indices = @transform_0, window_bounds = array<i64: 16, 32>}, {pipeline_mode = #tpu.pipeline_mode<synchronous>, transform_indices = @transform_1, window_bounds = array<i64: 1, 32>}, {pipeline_mode = #tpu.pipeline_mode<synchronous>, transform_indices = @transform_2, window_bounds = array<i64: 1, 32>}, {pipeline_mode = #tpu.pipeline_mode<synchronous>, transform_indices = @transform_3, window_bounds = array<i64: 32, 64>}, {pipeline_mode = #tpu.pipeline_mode<synchronous>, transform_indices = @transform_4, window_bounds = array<i64: 3, 32>}, {pipeline_mode = #tpu.pipeline_mode<synchronous>, transform_indices = @transform_5, window_bounds = array<i64: 1, 32>}, {pipeline_mode = #tpu.pipeline_mode<synchronous>, transform_indices = @transform_6, window_bounds = array<i64: 32, 32>}, {transform_indices = @transform_7, window_bounds = array<i64: 16, 32>}]} {
    %c0 = arith.constant 0 : index
    %c0_0 = arith.constant 0 : index
    %0 = vector.load %arg1[%c0, %c0_0] : memref<16x32xf32, #tpu.memory_space<vmem>>, vector<16x32xf32>
    %cst = arith.constant dense<0.000000e+00> : vector<16xf32>
    %1 = vector.multi_reduction <add>, %0, %cst [1] : vector<16x32xf32> to vector<16xf32>
    %2 = vector.shape_cast %1 : vector<16xf32> to vector<16x1xf32>
    %cst_1 = arith.constant 3.200000e+01 : f32
    %3 = vector.broadcast %cst_1 : f32 to vector<16x1xf32>
    %4 = arith.divf %2, %3 : vector<16x1xf32>
    %5 = vector.broadcast %4 : vector<16x1xf32> to vector<16x32xf32>
    %6 = arith.subf %0, %5 : vector<16x32xf32>
    %7 = arith.mulf %6, %6 : vector<16x32xf32>
    %cst_2 = arith.constant dense<0.000000e+00> : vector<16xf32>
    %8 = vector.multi_reduction <add>, %7, %cst_2 [1] : vector<16x32xf32> to vector<16xf32>
    %9 = vector.shape_cast %8 : vector<16xf32> to vector<16x1xf32>
    %cst_3 = arith.constant 3.200000e+01 : f32
    %10 = vector.broadcast %cst_3 : f32 to vector<16x1xf32>
    %11 = arith.divf %9, %10 : vector<16x1xf32>
    %cst_4 = arith.constant 9.99999974E-6 : f32
    %12 = vector.broadcast %cst_4 : f32 to vector<16x1xf32>
    %13 = arith.addf %11, %12 : vector<16x1xf32>
    %14 = math.rsqrt %13 : vector<16x1xf32>
    %15 = vector.broadcast %14 : vector<16x1xf32> to vector<16x32xf32>
    %16 = arith.mulf %6, %15 : vector<16x32xf32>
    %c0_5 = arith.constant 0 : index
    %c0_6 = arith.constant 0 : index
    %17 = vector.load %arg2[%c0_5, %c0_6] : memref<1x32xf32, #tpu.memory_space<vmem>>, vector<1x32xf32>
    %18 = vector.broadcast %17 : vector<1x32xf32> to vector<16x32xf32>
    %19 = arith.mulf %16, %18 : vector<16x32xf32>
    %c0_7 = arith.constant 0 : index
    %c0_8 = arith.constant 0 : index
    %20 = vector.load %arg3[%c0_7, %c0_8] : memref<1x32xf32, #tpu.memory_space<vmem>>, vector<1x32xf32>
    %21 = vector.broadcast %20 : vector<1x32xf32> to vector<16x32xf32>
    %22 = arith.addf %19, %21 : vector<16x32xf32>
    %23 = arith.truncf %22 : vector<16x32xf32> to vector<16x32xbf16>
    %c0_9 = arith.constant 0 : index
    %c0_10 = arith.constant 0 : index
    %24 = vector.load %arg4[%c0_9, %c0_10] : memref<32x64xbf16, #tpu.memory_space<vmem>>, vector<32x64xbf16>
    %cst_11 = arith.constant dense<0.000000e+00> : vector<16x64xf32>
    %25 = tpu.matmul %23, %24, %cst_11 {dimension_numbers = #tpu.dot_dimension_numbers<[1], [0], [0], [1], [0, 0, 1, 1], [], []>} : vector<16x32xbf16>, vector<32x64xbf16>, vector<16x64xf32> -> vector<16x64xf32>
    %26 = vector.extract_strided_slice %25 {offsets = [0, 0], sizes = [16, 32], strides = [1, 1]} : vector<16x64xf32> to vector<16x32xf32>
    %27 = vector.extract_strided_slice %25 {offsets = [0, 32], sizes = [16, 32], strides = [1, 1]} : vector<16x64xf32> to vector<16x32xf32>
    %cst_12 = arith.constant 5.000000e-01 : f32
    %28 = vector.broadcast %cst_12 : f32 to vector<16x32xf32>
    %29 = arith.mulf %28, %27 : vector<16x32xf32>
    %30 = math.tanh %29 : vector<16x32xf32>
    %cst_13 = arith.constant 1.000000e+00 : f32
    %31 = vector.broadcast %cst_13 : f32 to vector<16x32xf32>
    %32 = arith.addf %30, %31 : vector<16x32xf32>
    %cst_14 = arith.constant 5.000000e-01 : f32
    %33 = vector.broadcast %cst_14 : f32 to vector<16x32xf32>
    %34 = arith.mulf %33, %32 : vector<16x32xf32>
    %35 = arith.mulf %26, %34 : vector<16x32xf32>
    %36 = tpu.iota {dimensions = array<i32: 0>} : vector<16x1xi32>
    %c16_i32 = arith.constant 16 : i32
    %c0_i32 = arith.constant 0 : i32
    %37 = arith.cmpi eq, %c16_i32, %c0_i32 : i32
    %c1_i32 = arith.constant 1 : i32
    %38 = arith.select %37, %c1_i32, %c16_i32 : i32
    %39 = vector.broadcast %38 : i32 to vector<16x1xi32>
    %40 = arith.remsi %36, %39 : vector<16x1xi32>
    %c0_i32_15 = arith.constant 0 : i32
    %41 = vector.broadcast %c0_i32_15 : i32 to vector<16x1xi32>
    %42 = arith.cmpi ne, %40, %41 : vector<16x1xi32>
    %c0_i32_16 = arith.constant 0 : i32
    %43 = vector.broadcast %c0_i32_16 : i32 to vector<16x1xi32>
    %44 = arith.cmpi slt, %40, %43 : vector<16x1xi32>
    %c0_i32_17 = arith.constant 0 : i32
    %45 = arith.cmpi slt, %38, %c0_i32_17 : i32
    %46 = vector.broadcast %45 : i1 to vector<16x1xi1>
    %47 = vector.broadcast %46 : vector<16x1xi1> to vector<16x1xi1>
    %48 = arith.xori %44, %47 : vector<16x1xi1>
    %49 = arith.andi %48, %42 : vector<16x1xi1>
    %50 = vector.broadcast %38 : i32 to vector<16x1xi32>
    %51 = arith.addi %40, %50 : vector<16x1xi32>
    %52 = arith.select %49, %51, %40 : vector<16x1xi1>, vector<16x1xi32>
    %c0_i32_18 = arith.constant 0 : i32
    %53 = vector.broadcast %c0_i32_18 : i32 to vector<16x1xi32>
    %54 = arith.cmpi ne, %52, %53 : vector<16x1xi32>
    %c1_i32_19 = arith.constant 1 : i32
    %55 = tpu.dynamic_rotate %35 by %c1_i32_19 dim 0 : vector<16x32xf32>, i32 -> vector<16x32xf32>
    %cst_20 = arith.constant 0.000000e+00 : f32
    %56 = vector.shape_cast %54 : vector<16x1xi1> to vector<16x1xi1>
    %57 = vector.broadcast %56 : vector<16x1xi1> to vector<16x32xi1>
    %58 = vector.broadcast %cst_20 : f32 to vector<16x32xf32>
    %59 = arith.select %57, %55, %58 : vector<16x32xi1>, vector<16x32xf32>
    %c15_i32 = arith.constant 15 : i32
    %60 = vector.broadcast %c15_i32 : i32 to vector<16x1xi32>
    %61 = arith.cmpi ne, %52, %60 : vector<16x1xi32>
    %c15_i32_21 = arith.constant 15 : i32
    %62 = tpu.dynamic_rotate %35 by %c15_i32_21 dim 0 : vector<16x32xf32>, i32 -> vector<16x32xf32>
    %cst_22 = arith.constant 0.000000e+00 : f32
    %63 = vector.shape_cast %61 : vector<16x1xi1> to vector<16x1xi1>
    %64 = vector.broadcast %63 : vector<16x1xi1> to vector<16x32xi1>
    %65 = vector.broadcast %cst_22 : f32 to vector<16x32xf32>
    %66 = arith.select %64, %62, %65 : vector<16x32xi1>, vector<16x32xf32>
    %c0_23 = arith.constant 0 : index
    %c0_24 = arith.constant 0 : index
    %67 = vector.load %arg5[%c0_23, %c0_24] : memref<3x32xf32, #tpu.memory_space<vmem>>, vector<3x32xf32>
    %68 = vector.extract_strided_slice %67 {offsets = [0, 0], sizes = [1, 32], strides = [1, 1]} : vector<3x32xf32> to vector<1x32xf32>
    %69 = vector.broadcast %68 : vector<1x32xf32> to vector<16x32xf32>
    %70 = arith.mulf %59, %69 : vector<16x32xf32>
    %71 = vector.extract_strided_slice %67 {offsets = [1, 0], sizes = [1, 32], strides = [1, 1]} : vector<3x32xf32> to vector<1x32xf32>
    %72 = vector.broadcast %71 : vector<1x32xf32> to vector<16x32xf32>
    %73 = arith.mulf %35, %72 : vector<16x32xf32>
    %74 = arith.addf %70, %73 : vector<16x32xf32>
    %75 = vector.extract_strided_slice %67 {offsets = [2, 0], sizes = [1, 32], strides = [1, 1]} : vector<3x32xf32> to vector<1x32xf32>
    %76 = vector.broadcast %75 : vector<1x32xf32> to vector<16x32xf32>
    %77 = arith.mulf %66, %76 : vector<16x32xf32>
    %78 = arith.addf %74, %77 : vector<16x32xf32>
    %c0_25 = arith.constant 0 : index
    %c0_26 = arith.constant 0 : index
    %79 = vector.load %arg6[%c0_25, %c0_26] : memref<1x32xf32, #tpu.memory_space<vmem>>, vector<1x32xf32>
    %80 = vector.broadcast %79 : vector<1x32xf32> to vector<16x32xf32>
    %81 = arith.addf %78, %80 : vector<16x32xf32>
    %cst_27 = arith.constant 5.000000e-01 : f32
    %82 = vector.broadcast %cst_27 : f32 to vector<16x32xf32>
    %83 = arith.mulf %82, %81 : vector<16x32xf32>
    %84 = math.tanh %83 : vector<16x32xf32>
    %cst_28 = arith.constant 1.000000e+00 : f32
    %85 = vector.broadcast %cst_28 : f32 to vector<16x32xf32>
    %86 = arith.addf %84, %85 : vector<16x32xf32>
    %cst_29 = arith.constant 5.000000e-01 : f32
    %87 = vector.broadcast %cst_29 : f32 to vector<16x32xf32>
    %88 = arith.mulf %87, %86 : vector<16x32xf32>
    %89 = arith.mulf %81, %88 : vector<16x32xf32>
    %90 = arith.truncf %89 : vector<16x32xf32> to vector<16x32xbf16>
    %c0_30 = arith.constant 0 : index
    %c0_31 = arith.constant 0 : index
    %91 = vector.load %arg7[%c0_30, %c0_31] : memref<32x32xbf16, #tpu.memory_space<vmem>>, vector<32x32xbf16>
    %cst_32 = arith.constant dense<0.000000e+00> : vector<16x32xf32>
    %92 = tpu.matmul %90, %91, %cst_32 {dimension_numbers = #tpu.dot_dimension_numbers<[1], [0], [0], [1], [0, 0, 1, 1], [], []>} : vector<16x32xbf16>, vector<32x32xbf16>, vector<16x32xf32> -> vector<16x32xf32>
    %c0_33 = arith.constant 0 : index
    %c0_34 = arith.constant 0 : index
    %93 = vector.load %arg8[%c0_33, %c0_34] : memref<16x32xf32, #tpu.memory_space<vmem>>, vector<16x32xf32>
    tpu.vector_store %arg8[%c0_33, %c0_34], %92 {strides = array<i32>} : memref<16x32xf32, #tpu.memory_space<vmem>>, vector<16x32xf32>,
    return
  }
  func.func @transform_0(%arg0: i32) -> (i32, i32) {
    %c0_i32 = arith.constant 0 : i32
    %c0_i32_0 = arith.constant 0 : i32
    return %arg0, %c0_i32 : i32, i32
  }
  func.func @transform_1(%arg0: i32) -> (i32, i32) {
    %c0_i32 = arith.constant 0 : i32
    %c0_i32_0 = arith.constant 0 : i32
    %c0_i32_1 = arith.constant 0 : i32
    return %c0_i32, %c0_i32_0 : i32, i32
  }
  func.func @transform_2(%arg0: i32) -> (i32, i32) {
    %c0_i32 = arith.constant 0 : i32
    %c0_i32_0 = arith.constant 0 : i32
    %c0_i32_1 = arith.constant 0 : i32
    return %c0_i32, %c0_i32_0 : i32, i32
  }
  func.func @transform_3(%arg0: i32) -> (i32, i32) {
    %c0_i32 = arith.constant 0 : i32
    %c0_i32_0 = arith.constant 0 : i32
    %c0_i32_1 = arith.constant 0 : i32
    return %c0_i32, %c0_i32_0 : i32, i32
  }
  func.func @transform_4(%arg0: i32) -> (i32, i32) {
    %c0_i32 = arith.constant 0 : i32
    %c0_i32_0 = arith.constant 0 : i32
    %c0_i32_1 = arith.constant 0 : i32
    return %c0_i32, %c0_i32_0 : i32, i32
  }
  func.func @transform_5(%arg0: i32) -> (i32, i32) {
    %c0_i32 = arith.constant 0 : i32
    %c0_i32_0 = arith.constant 0 : i32
    %c0_i32_1 = arith.constant 0 : i32
    return %c0_i32, %c0_i32_0 : i32, i32
  }
  func.func @transform_6(%arg0: i32) -> (i32, i32) {
    %c0_i32 = arith.constant 0 : i32
    %c0_i32_0 = arith.constant 0 : i32
    %c0_i32_1 = arith.constant 0 : i32
    return %c0_i32, %c0_i32_0 : i32, i32
  }
  func.func @transform_7(%arg0: i32) -> (i32, i32) {
    %c0_i32 = arith.constant 0 : i32
    %c0_i32_0 = arith.constant 0 : i32
    return %arg0, %c0_i32 : i32, i32
  }
}

</mosaic_0001>

<llo_original>
// kernel: tpu_custom_call.1
$region0: #{tpu_custom_call.1}
  #allocation0 [shape = 'u32[]', space=smem, size = 0x4, offset = 0x4, fixed_abs, tag = 'smem constant byte address 0x4 - core index']
  #allocation1 [shape = 'u32[144,128]{1,0:T(1,128)}', space=vmem, size = 0x12000, scoped, tag = 'internal scratch']
  %s0 = inlined_call_operand.hbm [shape: f32[8,128], index: 0, kind: input, shape index: {}]
  %s1 = inlined_call_operand.hbm [shape: f32[16,128], index: 1, kind: output, shape index: {}]
  %s2 = sld [smem:[#allocation0]]
  $region41: #{tpu_custom_call.1} parent=0
    _
  %s4 = ssub.s32 1, %s2
  %s5 = scalar_select 0, %s4, %s2
  $region1: #{tpu_custom_call.1} parent=0
    #allocation2 [shape = 'u8[4096]{0}', space=vmem, size = 0x1000, scoped, tag = 'input window, operand 0, single buffered']
    #allocation3 [shape = 's32[2]{0}', space=sflag, size = 0x8, scoped, tag = 'scoped memory for tpu_custom_call.1']
    #allocation4 [shape = 's32[2]{0}', space=sflag, size = 0x8, scoped, tag = 'scoped memory for tpu_custom_call.1']
    #allocation5 [shape = 'u8[8192]{0}', space=vmem, size = 0x2000, scoped, tag = 'output window, operand 0']
    %6 = vsyncpa [#allocation3], 0
    %7 = vsyncpa [#allocation4], 0
    %s8 = scalar_lea.sflag [#allocation4], 1
    %9 = vsyncpa %s8, 0
    loop: start=0, step=1, limit=4
    $region2: #{tpu_custom_call.1} parent=1 // loop_pre_header
      _
    $region3: #{tpu_custom_call.1} parent=1 // loop_header
      %s11 = sphi 0, %s15
      %p12 = scmp.ge.s32.totalorder %s11, 4
      %s19 = sphi 0, %s19
      %s21 = sphi 0, %s19
      %s22 = sphi 0, %s21
      %s36 = sphi 0, %s22
      %s42 = sphi 0, %s44
      %s45 = sphi 0, %s42
      %s46 = sphi 0, %s45
      %s62 = sphi 0, %s46
    $region4: #{tpu_custom_call.1} parent=1 // loop_header_branch
      %14 = sbr.rel (%p12) target = $region8
    $region5: #{tpu_custom_call.1} parent=1 // loop_body
      %s16 = ssub.s32 %s11, 1
      %s17 = ssub.s32 %s11, 2
      %s18 = sadd.s32 %s11, 1
      %s20 = sadd.s32 %s19, 1
      %p23 = scmp.eq.s32.totalorder %s11, 1
      %p24 = scmp.ne.s32.totalorder %s19, %s21
      %p25 = scmp.eq.s32.totalorder %s11, 0
      %p26 = por %p24, %p25
      %p27 = scmp.ne.s32.totalorder %s19, %s21
      %p28 = scmp.eq.s32.totalorder %s16, 1
      %p29 = por %p27, %p28
      %p30 = scmp.ne.s32.totalorder %s21, %s22
      %p31 = scmp.eq.s32.totalorder %s16, 0
      %p32 = por %p30, %p31
      %p33 = scmp.ne.s32.totalorder %s21, %s22
      %p34 = scmp.eq.s32.totalorder %s17, 1
      %p35 = por %p33, %p34
      %p37 = scmp.ne.s32.totalorder %s22, %s36
      %p38 = scmp.eq.s32.totalorder %s17, 0
      %p39 = por %p37, %p38
      %s40 = ssub.s32 %s11, %s18
      %p41 = scmp.eq.s32.totalorder %s40, 0
      %s43 = sadd.s32 %s42, 1
      %s44 = scalar_select %p41, %s42, %s43
      %p47 = pneg %p41
      %p48 = scmp.eq.s32.totalorder %s11, 1
      %p49 = por %p47, %p48
      %p50 = scmp.ne.s32.totalorder %s42, %s45
      %p51 = scmp.eq.s32.totalorder %s11, 0
      %p52 = por %p50, %p51
      %p53 = scmp.ne.s32.totalorder %s42, %s45
      %p54 = scmp.eq.s32.totalorder %s16, 1
      %p55 = por %p53, %p54
      %p56 = scmp.ne.s32.totalorder %s45, %s46
      %p57 = scmp.eq.s32.totalorder %s16, 0
      %p58 = por %p56, %p57
      %p59 = scmp.ne.s32.totalorder %s45, %s46
      %p60 = scmp.eq.s32.totalorder %s17, 1
      %p61 = por %p59, %p60
      %p63 = scmp.ne.s32.totalorder %s46, %s62
      %p64 = scmp.eq.s32.totalorder %s17, 0
      %p65 = por %p63, %p64
      %p66 = scmp.le.s32.totalorder 1, %s11
      %p67 = scmp.lt.s32.totalorder %s11, 3
      %p68 = pnand %p66, %p67
      %p69 = pneg %p68
      // Predicated region
      $region9: #{tpu_custom_call.1} parent=5 // pred_check
        _
      $region10: #{tpu_custom_call.1} parent=5 // pred_check_branch
        %71 = sbr.rel (%p68) target = $region12
      $region11: #{tpu_custom_call.1} parent=5 // pred_region
        %s72 = ssub.s32 %s11, 1
        // Predicated region
        $region13: #{tpu_custom_call.1} parent=11 // pred_check
          %p73 = pneg %p32
        $region14: #{tpu_custom_call.1} parent=11 // pred_check_branch
          %75 = sbr.rel (%p73) target = $region16
        $region15: #{tpu_custom_call.1} parent=11 // pred_region
          %s77 = ssub.s32 128, 128
          %78 = vsyncadd [#allocation3], %s77
          %s80 = sshll.u32 [#allocation2], 4
          %s81 = int_to_ptr.vmem [resolvable:$true] %s80
          %83 = dma.hbm_to_vmem [thread:$0]  %s0, 128, %s81, [#allocation3]
        $region16: #{tpu_custom_call.1} parent=11 // pred_fallthru
          _
      $region12: #{tpu_custom_call.1} parent=5 // pred_fallthru
        _
      %p84 = scmp.lt.s32.totalorder %s11, 2
      // Predicated region
      $region17: #{tpu_custom_call.1} parent=5 // pred_check
        %p85 = pneg %p84
      $region18: #{tpu_custom_call.1} parent=5 // pred_check_branch
        %87 = sbr.rel (%p85) target = $region20
      $region19: #{tpu_custom_call.1} parent=5 // pred_region
        _
      $region20: #{tpu_custom_call.1} parent=5 // pred_fallthru
        _
      %p88 = scmp.le.s32.totalorder 1, %s11
      %p89 = scmp.lt.s32.totalorder %s11, 3
      %p90 = pnand %p88, %p89
      %p91 = pneg %p90
      // Predicated region
      $region21: #{tpu_custom_call.1} parent=5 // pred_check
        _
      $region22: #{tpu_custom_call.1} parent=5 // pred_check_branch
        %93 = sbr.rel (%p90) target = $region24
      $region23: #{tpu_custom_call.1} parent=5 // pred_region
        %s94 = ssub.s32 %s11, 1
        // Predicated region
        $region25: #{tpu_custom_call.1} parent=23 // pred_check
          %p95 = pneg %p32
        $region26: #{tpu_custom_call.1} parent=23 // pred_check_branch
          %97 = sbr.rel (%p95) target = $region28
        $region27: #{tpu_custom_call.1} parent=23 // pred_region
          %98 = dma.done [#allocation3], 128
        $region28: #{tpu_custom_call.1} parent=23 // pred_fallthru
          _
        %p99 = pneg %p32
        %p100 = pneg %p29
        %p101 = pneg %p58
        %p102 = pneg %p55
        %s103 = sand.u32 %s45, 1
        %s104 = scalar_lea.sflag [#allocation4], %s103
        %s105 = sand.u32 %s45, 1
        %s106 = smul.addr %s105, 8
        %s107 = scalar_lea.vmem [#allocation5], %s106
        %v108 = vld [vmem:[#allocation2] sm:$0xff]
        %109 = vst [vmem:[%s107] sm:$0xff] %v108
        %s110 = sand.u32 %s45, 1
        %s111 = scalar_lea.sflag [#allocation4], %s110
        %s112 = sand.u32 %s45, 1
        %s113 = smul.addr %s112, 8
        %s114 = scalar_lea.vmem [#allocation5], %s113
        // Predicated region
        $region29: #{tpu_custom_call.1} parent=23 // pred_check
          %p115 = pneg %p55
        $region30: #{tpu_custom_call.1} parent=23 // pred_check_branch
          %117 = sbr.rel (%p115) target = $region32
        $region31: #{tpu_custom_call.1} parent=23 // pred_region
          %s119 = ssub.s32 128, 128
          %120 = vsyncadd %s111, %s119
          %s121 = smul.addr %s16, 128
          %s122 = scalar_lea.hbm %s1, %s121
          %s124 = sshll.u32 %s114, 4
          %s125 = int_to_ptr.vmem [resolvable:$true] %s124
          %127 = dma.vmem_to_hbm [thread:$0]  %s125, 128, %s122, %s111
        $region32: #{tpu_custom_call.1} parent=23 // pred_fallthru
          _
      $region24: #{tpu_custom_call.1} parent=5 // pred_fallthru
        _
      %p128 = scmp.le.s32.totalorder 2, %s11
      // Predicated region
      $region33: #{tpu_custom_call.1} parent=5 // pred_check
        %p129 = pneg %p128
      $region34: #{tpu_custom_call.1} parent=5 // pred_check_branch
        %131 = sbr.rel (%p129) target = $region36
      $region35: #{tpu_custom_call.1} parent=5 // pred_region
        %s132 = ssub.s32 %s11, 2
        // Predicated region
        $region37: #{tpu_custom_call.1} parent=35 // pred_check
          %p133 = pneg %p61
        $region38: #{tpu_custom_call.1} parent=35 // pred_check_branch
          %135 = sbr.rel (%p133) target = $region40
        $region39: #{tpu_custom_call.1} parent=35 // pred_region
          %s136 = sand.u32 %s46, 1
          %s137 = scalar_lea.sflag [#allocation4], %s136
          %s138 = sand.u32 %s46, 1
          %s139 = smul.addr %s138, 8
          %s140 = scalar_lea.vmem [#allocation5], %s139
          %141 = dma.done %s137, 128
        $region40: #{tpu_custom_call.1} parent=35 // pred_fallthru
          _
      $region36: #{tpu_custom_call.1} parent=5 // pred_fallthru
        _
    $region6: #{tpu_custom_call.1} parent=1 // loop_footer
      %s15 = sadd.s32 1, %s11
    $region7: #{tpu_custom_call.1} parent=1 // loop_footer_branch
      %10 = sbr.rel target = $region3
    $region8: #{tpu_custom_call.1} parent=1 // loop_exit
      _
    %142 = vsyncpa [#allocation3], 1
    %s143 = scalar_lea.sflag [#allocation3], 1
    %144 = vsyncpa %s143, 1
    %145 = vsyncpa [#allocation4], 1
    %s146 = scalar_lea.sflag [#allocation4], 1
    %147 = vsyncpa %s146, 1

// kernel: tpu_custom_call.1
$region0: #{tpu_custom_call.1}
  #allocation0 [shape = 'u32[]', space=smem, size = 0x4, offset = 0x4, fixed_abs, tag = 'smem constant byte address 0x4 - core index']
  #allocation1 [shape = 'u32[144,128]{1,0:T(1,128)}', space=vmem, size = 0x12000, scoped, tag = 'internal scratch']
  %s0 = inlined_call_operand.hbm [shape: f32[32,32], index: 0, kind: input, shape index: {}]
  %s1 = inlined_call_operand.vmem [shape: f32[1,32], index: 1, kind: input, shape index: {}]
  %s2 = inlined_call_operand.vmem [shape: f32[1,32], index: 2, kind: input, shape index: {}]
  %s3 = inlined_call_operand.hbm [shape: bf16[32,64], index: 3, kind: input, shape index: {}]
  %s4 = inlined_call_operand.vmem [shape: f32[3,32], index: 4, kind: input, shape index: {}]
  %s5 = inlined_call_operand.hbm [shape: f32[1,32], index: 5, kind: input, shape index: {}]
  %s6 = inlined_call_operand.vmem [shape: bf16[32,32], index: 6, kind: input, shape index: {}]
  %s7 = inlined_call_operand.hbm [shape: f32[32,32], index: 7, kind: output, shape index: {}]
  %s8 = sld [smem:[#allocation0]]
  $region73: #{tpu_custom_call.1} parent=0
    _
  %s10 = ssub.s32 1, %s8
  %s11 = scalar_select 0, %s10, %s8
  $region1: #{tpu_custom_call.1} parent=0
    #allocation2 [shape = 'u8[16384]{0}', space=vmem, size = 0x4000, scoped, tag = 'input window, operand 0']
    #allocation3 [shape = 's32[2]{0}', space=sflag, size = 0x8, scoped, tag = 'scoped memory for tpu_custom_call.1']
    #allocation4 [shape = 's32[2]{0}', space=sflag, size = 0x8, scoped, tag = 'scoped memory for tpu_custom_call.1']
    #allocation5 [shape = 'u8[8192]{0}', space=vmem, size = 0x2000, scoped, tag = 'input window, operand 3, single buffered']
    #allocation6 [shape = 's32[1]{0}', space=sflag, size = 0x4, scoped, tag = 'scoped memory for tpu_custom_call.1']
    #allocation7 [shape = 'u8[512]{0}', space=vmem, size = 0x400, scoped, tag = 'input window, operand 5, single buffered']
    #allocation8 [shape = 'u8[16384]{0}', space=vmem, size = 0x4000, scoped, tag = 'output window, operand 0']
    %12 = vsyncpa [#allocation3], 0
    %s13 = scalar_lea.sflag [#allocation3], 1
    %14 = vsyncpa %s13, 0
    %15 = vsyncpa [#allocation6], 0
    %16 = vsyncpa [#allocation4], 0
    %s17 = scalar_lea.sflag [#allocation4], 1
    %18 = vsyncpa %s17, 0
    loop: start=0, step=1, limit=4
    $region2: #{tpu_custom_call.1} parent=1 // loop_pre_header
      _
    $region3: #{tpu_custom_call.1} parent=1 // loop_header
      %s20 = sphi 0, %s24
      %p21 = scmp.ge.s32.totalorder %s20, 4
      %s30 = sphi 0, %s32
      %s33 = sphi 0, %s30
      %s34 = sphi 0, %s33
      %s50 = sphi 0, %s34
      %s54 = sphi 0, %s54
      %s56 = sphi 0, %s54
      %s57 = sphi 0, %s56
      %s71 = sphi 0, %s57
      %s75 = sphi 0, %s75
      %s77 = sphi 0, %s75
      %s78 = sphi 0, %s77
      %s92 = sphi 0, %s78
      %s96 = sphi 0, %s96
      %s98 = sphi 0, %s96
      %s99 = sphi 0, %s98
      %s113 = sphi 0, %s99
      %s117 = sphi 0, %s117
      %s119 = sphi 0, %s117
      %s120 = sphi 0, %s119
      %s134 = sphi 0, %s120
      %s138 = sphi 0, %s138
      %s140 = sphi 0, %s138
      %s141 = sphi 0, %s140
      %s155 = sphi 0, %s141
      %s159 = sphi 0, %s159
      %s161 = sphi 0, %s159
      %s162 = sphi 0, %s161
      %s176 = sphi 0, %s162
      %s182 = sphi 0, %s184
      %s185 = sphi 0, %s182
      %s186 = sphi 0, %s185
      %s202 = sphi 0, %s186
    $region4: #{tpu_custom_call.1} parent=1 // loop_header_branch
      %23 = sbr.rel (%p21) target = $region8
    $region5: #{tpu_custom_call.1} parent=1 // loop_body
      %s25 = ssub.s32 %s20, 1
      %s26 = ssub.s32 %s20, 2
      %s27 = sadd.s32 %s20, 1
      %s28 = ssub.s32 %s20, %s27
      %p29 = scmp.eq.s32.totalorder %s28, 0
      %s31 = sadd.s32 %s30, 1
      %s32 = scalar_select %p29, %s30, %s31
      %p35 = pneg %p29
      %p36 = scmp.eq.s32.totalorder %s20, 1
      %p37 = por %p35, %p36
      %p38 = scmp.ne.s32.totalorder %s30, %s33
      %p39 = scmp.eq.s32.totalorder %s20, 0
      %p40 = por %p38, %p39
      %p41 = scmp.ne.s32.totalorder %s30, %s33
      %p42 = scmp.eq.s32.totalorder %s25, 1
      %p43 = por %p41, %p42
      %p44 = scmp.ne.s32.totalorder %s33, %s34
      %p45 = scmp.eq.s32.totalorder %s25, 0
      %p46 = por %p44, %p45
      %p47 = scmp.ne.s32.totalorder %s33, %s34
      %p48 = scmp.eq.s32.totalorder %s26, 1
      %p49 = por %p47, %p48
      %p51 = scmp.ne.s32.totalorder %s34, %s50
      %p52 = scmp.eq.s32.totalorder %s26, 0
      %p53 = por %p51, %p52
      %s55 = sadd.s32 %s54, 1
      %p58 = scmp.eq.s32.totalorder %s20, 1
      %p59 = scmp.ne.s32.totalorder %s54, %s56
      %p60 = scmp.eq.s32.totalorder %s20, 0
      %p61 = por %p59, %p60
      %p62 = scmp.ne.s32.totalorder %s54, %s56
      %p63 = scmp.eq.s32.totalorder %s25, 1
      %p64 = por %p62, %p63
      %p65 = scmp.ne.s32.totalorder %s56, %s57
      %p66 = scmp.eq.s32.totalorder %s25, 0
      %p67 = por %p65, %p66
      %p68 = scmp.ne.s32.totalorder %s56, %s57
      %p69 = scmp.eq.s32.totalorder %s26, 1
      %p70 = por %p68, %p69
      %p72 = scmp.ne.s32.totalorder %s57, %s71
      %p73 = scmp.eq.s32.totalorder %s26, 0
      %p74 = por %p72, %p73
      %s76 = sadd.s32 %s75, 1
      %p79 = scmp.eq.s32.totalorder %s20, 1
      %p80 = scmp.ne.s32.totalorder %s75, %s77
      %p81 = scmp.eq.s32.totalorder %s20, 0
      %p82 = por %p80, %p81
      %p83 = scmp.ne.s32.totalorder %s75, %s77
      %p84 = scmp.eq.s32.totalorder %s25, 1
      %p85 = por %p83, %p84
      %p86 = scmp.ne.s32.totalorder %s77, %s78
      %p87 = scmp.eq.s32.totalorder %s25, 0
      %p88 = por %p86, %p87
      %p89 = scmp.ne.s32.totalorder %s77, %s78
      %p90 = scmp.eq.s32.totalorder %s26, 1
      %p91 = por %p89, %p90
      %p93 = scmp.ne.s32.totalorder %s78, %s92
      %p94 = scmp.eq.s32.totalorder %s26, 0
      %p95 = por %p93, %p94
      %s97 = sadd.s32 %s96, 1
      %p100 = scmp.eq.s32.totalorder %s20, 1
      %p101 = scmp.ne.s32.totalorder %s96, %s98
      %p102 = scmp.eq.s32.totalorder %s20, 0
      %p103 = por %p101, %p102
      %p104 = scmp.ne.s32.totalorder %s96, %s98
      %p105 = scmp.eq.s32.totalorder %s25, 1
      %p106 = por %p104, %p105
      %p107 = scmp.ne.s32.totalorder %s98, %s99
      %p108 = scmp.eq.s32.totalorder %s25, 0
      %p109 = por %p107, %p108
      %p110 = scmp.ne.s32.totalorder %s98, %s99
      %p111 = scmp.eq.s32.totalorder %s26, 1
      %p112 = por %p110, %p111
      %p114 = scmp.ne.s32.totalorder %s99, %s113
      %p115 = scmp.eq.s32.totalorder %s26, 0
      %p116 = por %p114, %p115
      %s118 = sadd.s32 %s117, 1
      %p121 = scmp.eq.s32.totalorder %s20, 1
      %p122 = scmp.ne.s32.totalorder %s117, %s119
      %p123 = scmp.eq.s32.totalorder %s20, 0
      %p124 = por %p122, %p123
      %p125 = scmp.ne.s32.totalorder %s117, %s119
      %p126 = scmp.eq.s32.totalorder %s25, 1
      %p127 = por %p125, %p126
      %p128 = scmp.ne.s32.totalorder %s119, %s120
      %p129 = scmp.eq.s32.totalorder %s25, 0
      %p130 = por %p128, %p129
      %p131 = scmp.ne.s32.totalorder %s119, %s120
      %p132 = scmp.eq.s32.totalorder %s26, 1
      %p133 = por %p131, %p132
      %p135 = scmp.ne.s32.totalorder %s120, %s134
      %p136 = scmp.eq.s32.totalorder %s26, 0
      %p137 = por %p135, %p136
      %s139 = sadd.s32 %s138, 1
      %p142 = scmp.eq.s32.totalorder %s20, 1
      %p143 = scmp.ne.s32.totalorder %s138, %s140
      %p144 = scmp.eq.s32.totalorder %s20, 0
      %p145 = por %p143, %p144
      %p146 = scmp.ne.s32.totalorder %s138, %s140
      %p147 = scmp.eq.s32.totalorder %s25, 1
      %p148 = por %p146, %p147
      %p149 = scmp.ne.s32.totalorder %s140, %s141
      %p150 = scmp.eq.s32.totalorder %s25, 0
      %p151 = por %p149, %p150
      %p152 = scmp.ne.s32.totalorder %s140, %s141
      %p153 = scmp.eq.s32.totalorder %s26, 1
      %p154 = por %p152, %p153
      %p156 = scmp.ne.s32.totalorder %s141, %s155
      %p157 = scmp.eq.s32.totalorder %s26, 0
      %p158 = por %p156, %p157
      %s160 = sadd.s32 %s159, 1
      %p163 = scmp.eq.s32.totalorder %s20, 1
      %p164 = scmp.ne.s32.totalorder %s159, %s161
      %p165 = scmp.eq.s32.totalorder %s20, 0
      %p166 = por %p164, %p165
      %p167 = scmp.ne.s32.totalorder %s159, %s161
      %p168 = scmp.eq.s32.totalorder %s25, 1
      %p169 = por %p167, %p168
      %p170 = scmp.ne.s32.totalorder %s161, %s162
      %p171 = scmp.eq.s32.totalorder %s25, 0
      %p172 = por %p170, %p171
      %p173 = scmp.ne.s32.totalorder %s161, %s162
      %p174 = scmp.eq.s32.totalorder %s26, 1
      %p175 = por %p173, %p174
      %p177 = scmp.ne.s32.totalorder %s162, %s176
      %p178 = scmp.eq.s32.totalorder %s26, 0
      %p179 = por %p177, %p178
      %s180 = ssub.s32 %s20, %s27
      %p181 = scmp.eq.s32.totalorder %s180, 0
      %s183 = sadd.s32 %s182, 1
      %s184 = scalar_select %p181, %s182, %s183
      %p187 = pneg %p181
      %p188 = scmp.eq.s32.totalorder %s20, 1
      %p189 = por %p187, %p188
      %p190 = scmp.ne.s32.totalorder %s182, %s185
      %p191 = scmp.eq.s32.totalorder %s20, 0
      %p192 = por %p190, %p191
      %p193 = scmp.ne.s32.totalorder %s182, %s185
      %p194 = scmp.eq.s32.totalorder %s25, 1
      %p195 = por %p193, %p194
      %p196 = scmp.ne.s32.totalorder %s185, %s186
      %p197 = scmp.eq.s32.totalorder %s25, 0
      %p198 = por %p196, %p197
      %p199 = scmp.ne.s32.totalorder %s185, %s186
      %p200 = scmp.eq.s32.totalorder %s26, 1
      %p201 = por %p199, %p200
      %p203 = scmp.ne.s32.totalorder %s186, %s202
      %p204 = scmp.eq.s32.totalorder %s26, 0
      %p205 = por %p203, %p204
      %p206 = scmp.le.s32.totalorder 1, %s20
      %p207 = scmp.lt.s32.totalorder %s20, 3
      %p208 = pnand %p206, %p207
      %p209 = pneg %p208
      // Predicated region
      $region9: #{tpu_custom_call.1} parent=5 // pred_check
        _
      $region10: #{tpu_custom_call.1} parent=5 // pred_check_branch
        %211 = sbr.rel (%p208) target = $region12
      $region11: #{tpu_custom_call.1} parent=5 // pred_region
        %s212 = ssub.s32 %s20, 1
        // Predicated region
        $region13: #{tpu_custom_call.1} parent=11 // pred_check
          %p213 = pneg %p67
        $region14: #{tpu_custom_call.1} parent=11 // pred_check_branch
          %215 = sbr.rel (%p213) target = $region16
        $region15: #{tpu_custom_call.1} parent=11 // pred_region
          _
        $region16: #{tpu_custom_call.1} parent=11 // pred_fallthru
          _
        // Predicated region
        $region17: #{tpu_custom_call.1} parent=11 // pred_check
          %p216 = pneg %p88
        $region18: #{tpu_custom_call.1} parent=11 // pred_check_branch
          %218 = sbr.rel (%p216) target = $region20
        $region19: #{tpu_custom_call.1} parent=11 // pred_region
          _
        $region20: #{tpu_custom_call.1} parent=11 // pred_fallthru
          _
        // Predicated region
        $region21: #{tpu_custom_call.1} parent=11 // pred_check
          %p219 = pneg %p109
        $region22: #{tpu_custom_call.1} parent=11 // pred_check_branch
          %221 = sbr.rel (%p219) target = $region24
        $region23: #{tpu_custom_call.1} parent=11 // pred_region
          %s223 = ssub.s32 256, 256
          %224 = vsyncadd [#allocation6], %s223
          %s225 = sshll.u32 [#allocation5], 4
          %s226 = int_to_ptr.vmem [resolvable:$true] %s225
          %231 = dma.hbm_to_vmem [thread:$0]  %s3, 256, %s226, [#allocation6], 64, 64, 4
        $region24: #{tpu_custom_call.1} parent=11 // pred_fallthru
          _
        // Predicated region
        $region25: #{tpu_custom_call.1} parent=11 // pred_check
          %p232 = pneg %p130
        $region26: #{tpu_custom_call.1} parent=11 // pred_check_branch
          %234 = sbr.rel (%p232) target = $region28
        $region27: #{tpu_custom_call.1} parent=11 // pred_region
          _
        $region28: #{tpu_custom_call.1} parent=11 // pred_fallthru
          _
        // Predicated region
        $region29: #{tpu_custom_call.1} parent=11 // pred_check
          %p235 = pneg %p151
        $region30: #{tpu_custom_call.1} parent=11 // pred_check_branch
          %237 = sbr.rel (%p235) target = $region32
        $region31: #{tpu_custom_call.1} parent=11 // pred_region
          %s239 = ssub.s32 16, 16
          %240 = vsyncadd [#allocation6], %s239
          %s242 = sshll.u32 [#allocation7], 4
          %s243 = int_to_ptr.vmem [resolvable:$true] %s242
          %245 = dma.hbm_to_vmem [thread:$0]  %s5, 16, %s243, [#allocation6]
        $region32: #{tpu_custom_call.1} parent=11 // pred_fallthru
          _
        // Predicated region
        $region33: #{tpu_custom_call.1} parent=11 // pred_check
          %p246 = pneg %p172
        $region34: #{tpu_custom_call.1} parent=11 // pred_check_branch
          %248 = sbr.rel (%p246) target = $region36
        $region35: #{tpu_custom_call.1} parent=11 // pred_region
          _
        $region36: #{tpu_custom_call.1} parent=11 // pred_fallthru
          _
      $region12: #{tpu_custom_call.1} parent=5 // pred_fallthru
        _
      %p249 = scmp.lt.s32.totalorder %s20, 2
      // Predicated region
      $region37: #{tpu_custom_call.1} parent=5 // pred_check
        %p250 = pneg %p249
      $region38: #{tpu_custom_call.1} parent=5 // pred_check_branch
        %252 = sbr.rel (%p250) target = $region40
      $region39: #{tpu_custom_call.1} parent=5 // pred_region
        // Predicated region
        $region41: #{tpu_custom_call.1} parent=39 // pred_check
          %p253 = pneg %p40
        $region42: #{tpu_custom_call.1} parent=39 // pred_check_branch
          %255 = sbr.rel (%p253) target = $region44
        $region43: #{tpu_custom_call.1} parent=39 // pred_region
          %s256 = sand.u32 %s30, 1
          %s257 = scalar_lea.sflag [#allocation3], %s256
          %s258 = sand.u32 %s30, 1
          %s259 = smul.addr %s258, 16
          %s260 = scalar_lea.vmem [#allocation2], %s259
          %s261 = smul.u32 2, %s20
          %s263 = ssub.s32 256, 256
          %264 = vsyncadd %s257, %s263
          %s265 = smul.addr %s261, 128
          %s266 = scalar_lea.hbm %s0, %s265
          %s267 = sshll.u32 %s260, 4
          %s268 = int_to_ptr.vmem [resolvable:$true] %s267
          %273 = dma.hbm_to_vmem [thread:$0]  %s266, 256, %s268, %s257, 128, 128, 8
        $region44: #{tpu_custom_call.1} parent=39 // pred_fallthru
          _
      $region40: #{tpu_custom_call.1} parent=5 // pred_fallthru
        _
      %p274 = scmp.le.s32.totalorder 1, %s20
      %p275 = scmp.lt.s32.totalorder %s20, 3
      %p276 = pnand %p274, %p275
      %p277 = pneg %p276
      // Predicated region
      $region45: #{tpu_custom_call.1} parent=5 // pred_check
        _
      $region46: #{tpu_custom_call.1} parent=5 // pred_check_branch
        %279 = sbr.rel (%p276) target = $region48
      $region47: #{tpu_custom_call.1} parent=5 // pred_region
        %s280 = ssub.s32 %s20, 1
        %s281 = sand.u32 %s33, 1
        %s282 = scalar_lea.sflag [#allocation3], %s281
        %s283 = sand.u32 %s33, 1
        %s284 = smul.addr %s283, 16
        %s285 = scalar_lea.vmem [#allocation2], %s284
        // Predicated region
        $region49: #{tpu_custom_call.1} parent=47 // pred_check
          %p286 = pneg %p46
        $region50: #{tpu_custom_call.1} parent=47 // pred_check_branch
          %288 = sbr.rel (%p286) target = $region52
        $region51: #{tpu_custom_call.1} parent=47 // pred_region
          %289 = dma.done %s282, 256
        $region52: #{tpu_custom_call.1} parent=47 // pred_fallthru
          _
        // Predicated region
        $region53: #{tpu_custom_call.1} parent=47 // pred_check
          %p290 = pneg %p109
        $region54: #{tpu_custom_call.1} parent=47 // pred_check_branch
          %292 = sbr.rel (%p290) target = $region56
        $region55: #{tpu_custom_call.1} parent=47 // pred_region
          %293 = dma.done [#allocation6], 256
        $region56: #{tpu_custom_call.1} parent=47 // pred_fallthru
          _
        // Predicated region
        $region57: #{tpu_custom_call.1} parent=47 // pred_check
          %p294 = pneg %p151
        $region58: #{tpu_custom_call.1} parent=47 // pred_check_branch
          %296 = sbr.rel (%p294) target = $region60
        $region59: #{tpu_custom_call.1} parent=47 // pred_region
          %297 = dma.done [#allocation6], 16
        $region60: #{tpu_custom_call.1} parent=47 // pred_fallthru
          _
        %s298 = sand.u32 %s33, 1
        %s299 = scalar_lea.sflag [#allocation3], %s298
        %s300 = sand.u32 %s33, 1
        %s301 = smul.addr %s300, 16
        %s302 = scalar_lea.vmem [#allocation2], %s301
        %p303 = pneg %p46
        %p304 = pneg %p43
        %p305 = pneg %p67
        %p306 = pneg %p64
        %p307 = pneg %p88
        %p308 = pneg %p85
        %p309 = pneg %p109
        %p310 = pneg %p106
        %p311 = pneg %p130
        %p312 = pneg %p127
        %p313 = pneg %p151
        %p314 = pneg %p148
        %p315 = pneg %p172
        %p316 = pneg %p169
        %p317 = pneg %p198
        %p318 = pneg %p195
        %s319 = sand.u32 %s185, 1
        %s320 = scalar_lea.sflag [#allocation4], %s319
        %s321 = sand.u32 %s185, 1
        %s322 = smul.addr %s321, 16
        %s323 = scalar_lea.vmem [#allocation8], %s322
        %s324 = smul.u32 2, %s25
        %s325 = smul.u32 2, %s25
        %v327 = vld [vmem:[%s285] sm:$0xff]
        %v328 = vld [vmem:[%s285 + $0x8] sm:$0xff]
        %vm329 = vcmask 261120
        %v330 = vsel %vm329, %v327, 0.0
        %331 = vadd.xlane.f32.xlu0 %v330
        %v332 = vpop.xlane.xlu0 %331
        %v333 = vsel %vm329, %v328, 0.0
        %334 = vadd.xlane.f32.xlu0 %v333
        %v335 = vpop.xlane.xlu0 %334
        %v336 = vrcp.pop 32.0
        %v337 = vmul.f32 %v332, %v336
        %v338 = vmul.f32 %v335, %v336
        %v339 = vsub.f32 %v327, %v337
        %v340 = vsub.f32 %v328, %v338
        %v341 = vmul.f32 %v339, %v339
        %v342 = vmul.f32 %v340, %v340
        %v343 = vsel %vm329, %v341, 0.0
        %344 = vadd.xlane.f32.xlu0 %v343
        %v345 = vpop.xlane.xlu0 %344
        %v346 = vsel %vm329, %v342, 0.0
        %347 = vadd.xlane.f32.xlu0 %v346
        %v348 = vpop.xlane.xlu0 %347
        %v349 = vmul.f32 %v345, %v336
        %v350 = vmul.f32 %v348, %v336
        %v351 = vadd.f32 %v349, 1e-05
        %v352 = vadd.f32 %v350, 1e-05
        %v353 = vrsqrt.pop %v351
        %v354 = vrsqrt.pop %v352
        %v355 = vmul.f32 %v339, %v353
        %v356 = vmul.f32 %v340, %v354
        %v357 = vld [vmem:[%s1] sm:$0x1]
        %v359 = vlaneseq
        %v360 = vshrl.u32 %v359, 7
        %v361 = vsub.s32 0, %v360
        %v362 = vrot.slane %v357, %v361
        %v364 = vmul.f32 %v355, %v362
        %v365 = vmul.f32 %v356, %v362
        %v366 = vld [vmem:[%s2] sm:$0x1]
        %v368 = vlaneseq
        %v369 = vshrl.u32 %v368, 7
        %v370 = vsub.s32 0, %v369
        %v371 = vrot.slane %v366, %v370
        %v373 = vadd.f32 %v364, %v371
        %v374 = vadd.f32 %v365, %v371
        %v375 = vpack.c.bf16 %v374, %v373
        %v376 = vld [vmem:[#allocation5] sm:$0xf]
        %v377 = vld [vmem:[#allocation5 + $0x4] sm:$0xf]
        %v378 = vld [vmem:[#allocation5 + $0x8] sm:$0xf]
        %v379 = vld [vmem:[#allocation5 + $0xc] sm:$0xf]
        %v384 = vunpack.c.l.b16 %v376
        %v385 = vunpack.c.l.b16 %v377
        %v386 = vunpack.c.l.b16 %v378
        %v387 = vunpack.c.l.b16 %v379
        %v388 = vpack.c.b16 %v385, %v384
        %v389 = vpack.c.b16 %v387, %v386
        %v393 = vsel %vm329, %v375, 0
        %395 = vmatprep.subr.bf16.mxu0 0
        %396 = vmatpush1.bf16.msra.mxu0 %v388
        %397 = vmatprep.subr.bf16.mxu0 0
        %398 = vmatpush1.bf16.msra.mxu0 %v389
        %399 = vmatprep.subr.bf16.mxu0 0
        %400 = vmatpush1.bf16.msra.mxu0 0
        %401 = vmatprep.subr.bf16.mxu0 0
        %402 = vmatpush1.bf16.msra.mxu0 0
        %403 = vmatprep.subr.bf16.mxu0 0
        %404 = vmatpush1.bf16.msra.mxu0 0
        %405 = vmatprep.subr.bf16.mxu0 0
        %406 = vmatpush1.bf16.msra.mxu0 0
        %407 = vmatprep.subr.bf16.mxu0 0
        %408 = vmatpush1.bf16.msra.mxu0 0
        %409 = vmatprep.subr.bf16.mxu0 0
        %410 = vmatpush1.bf16.msra.mxu0 0
        %411 = vmatprep.subr.bf16.mxu0 0
        %412 = vmatpush1.bf16.msra.mxu0 0
        %413 = vmatprep.subr.bf16.mxu0 0
        %414 = vmatpush1.bf16.msra.mxu0 0
        %415 = vmatprep.subr.bf16.mxu0 0
        %416 = vmatpush1.bf16.msra.mxu0 0
        %417 = vmatprep.subr.bf16.mxu0 0
        %418 = vmatpush1.bf16.msra.mxu0 0
        %419 = vmatprep.subr.bf16.mxu0 0
        %420 = vmatpush1.bf16.msra.mxu0 0
        %421 = vmatprep.subr.bf16.mxu0 0
        %422 = vmatpush1.bf16.msra.mxu0 0
        %423 = vmatprep.subr.bf16.mxu0 0
        %424 = vmatpush1.bf16.msra.mxu0 0
        %425 = vmatprep.subr.bf16.mxu0 0
        %426 = vmatpush1.bf16.msra.mxu0 0
        %427 = vmatprep.mubr.bf16.mxu0 0
        %428 = vmatmul.mubr.bf16.gmra.mrb[0].mxu0 %v393
        %v429 = vpop.f32.mrb[0].mxu0
        %v430 = vadd.f32 0.0, %v429
        %v431 = vpop.f32.mrb[0].mxu0
        %v432 = vpop.f32.mrb[0].mxu0
        %v433 = vadd.f32 0.0, %v432
        %v434 = vpop.f32.mrb[0].mxu0
        %435 = vdwg.mxu0
        %v436 = vmul.f32 %v430, 0.5
        %v437 = vmul.f32 %v433, 0.5
        %v438 = vtanh.pop %v436
        %v439 = vtanh.pop %v437
        %v440 = vadd.f32 %v438, 1.0
        %v441 = vadd.f32 %v439, 1.0
        %v442 = vmul.f32 %v440, 0.5
        %v443 = vmul.f32 %v441, 0.5
        %446 = vrot.lane.b32.xlu0 %v442, 96
        %v447 = vpop.permute.xlu0 %446
        %448 = vrot.lane.b32.xlu0 %v443, 96
        %v449 = vpop.permute.xlu0 %448
        %v452 = vmul.f32 %v430, %v447
        %v453 = vmul.f32 %v433, %v449
        %v454 = vlaneseq
        %v455 = vshrl.u32 %v454, 7
        %v456 = vadd.s32 %v455, 8
        %vm457 = vcmp.lt.s32.totalorder %v455, 0
        %v458 = vsub.s32 0, %v455
        %v459 = vsel %vm457, %v458, %v455
        %v460 = vshrl.u32 %v459, 4
        %v461 = vand.u32 %v459, 15
        %v462 = vsub.s32 0, %v461
        %v463 = vsel %vm457, %v462, %v461
        %vm464 = vcmp.lt.s32.totalorder %v456, 0
        %v465 = vsub.s32 0, %v456
        %v466 = vsel %vm464, %v465, %v456
        %v467 = vshrl.u32 %v466, 4
        %v468 = vand.u32 %v466, 15
        %v469 = vsub.s32 0, %v468
        %v470 = vsel %vm464, %v469, %v468
        %vm471 = vcmp.ne.s32.totalorder %v463, 0
        %vm472 = vcmp.ne.s32.totalorder %v470, 0
        %vm473 = vcmp.lt.s32.totalorder %v463, 0
        %vm474 = vcmp.lt.s32.totalorder %v470, 0
        %vm475 = vmand %vm473, %vm471
        %vm476 = vmand %vm474, %vm472
        %v477 = vadd.s32 %v463, 16
        %v478 = vadd.s32 %v470, 16
        %v479 = vsel %vm475, %v477, %v463
        %v480 = vsel %vm476, %v478, %v470
        %vm481 = vcmp.ne.s32.totalorder %v479, 0
        %vm482 = vcmp.ne.s32.totalorder %v480, 0
        %v483 = vrot.slane %v452, 7
        %v484 = vrot.slane %v453, 7
        %vm485 = vcmp.lt.s32.totalorder %v455, 1
        %v486 = vsel %vm485, %v483, %v484
        %v487 = vsel %vm485, %v484, %v483
        %v488 = vsel %vm481, 1, 0
        %v489 = vsel %vm482, 1, 0
        %vm490 = vcmp.eq.s32.totalorder %v488, 1
        %vm491 = vcmp.eq.s32.totalorder %v489, 1
        %v492 = vsel %vm490, %v487, 0.0
        %v493 = vsel %vm491, %v486, 0.0
        %vm494 = vcmp.ne.s32.totalorder %v479, 15
        %vm495 = vcmp.ne.s32.totalorder %v480, 15
        %v496 = vrot.slane %v452, 1
        %v497 = vrot.slane %v453, 1
        %vm498 = vcmp.lt.s32.totalorder %v455, 7
        %v499 = vsel %vm498, %v496, %v497
        %v500 = vsel %vm498, %v497, %v496
        %v501 = vsel %vm494, 1, 0
        %v502 = vsel %vm495, 1, 0
        %vm503 = vcmp.eq.s32.totalorder %v501, 1
        %vm504 = vcmp.eq.s32.totalorder %v502, 1
        %v505 = vsel %vm503, %v499, 0.0
        %v506 = vsel %vm504, %v500, 0.0
        %v507 = vld [vmem:[%s4] sm:$0x7]
        %v508 = vlaneseq
        %v509 = vshrl.u32 %v508, 7
        %v510 = vsub.s32 0, %v509
        %v511 = vrot.slane %v507, %v510
        %v512 = vmul.f32 %v492, %v511
        %v513 = vmul.f32 %v493, %v511
        %v514 = vlaneseq
        %v515 = vshrl.u32 %v514, 7
        %v516 = vsub.s32 1, %v515
        %v517 = vrot.slane %v507, %v516
        %v518 = vmul.f32 %v452, %v517
        %v519 = vmul.f32 %v453, %v517
        %v520 = vadd.f32 %v512, %v518
        %v521 = vadd.f32 %v513, %v519
        %v522 = vlaneseq
        %v523 = vshrl.u32 %v522, 7
        %v524 = vsub.s32 2, %v523
        %v525 = vrot.slane %v507, %v524
        %v526 = vmul.f32 %v505, %v525
        %v527 = vmul.f32 %v506, %v525
        %v528 = vadd.f32 %v520, %v526
        %v529 = vadd.f32 %v521, %v527
        %v530 = vld [vmem:[#allocation7] sm:$0x1]
        %v532 = vlaneseq
        %v533 = vshrl.u32 %v532, 7
        %v534 = vsub.s32 0, %v533
        %v535 = vrot.slane %v530, %v534
        %v537 = vadd.f32 %v528, %v535
        %v538 = vadd.f32 %v529, %v535
        %v539 = vmul.f32 %v537, 0.5
        %v540 = vmul.f32 %v538, 0.5
        %v541 = vtanh.pop %v539
        %v542 = vtanh.pop %v540
        %v543 = vadd.f32 %v541, 1.0
        %v544 = vadd.f32 %v542, 1.0
        %v545 = vmul.f32 %v543, 0.5
        %v546 = vmul.f32 %v544, 0.5
        %v547 = vmul.f32 %v537, %v545
        %v548 = vmul.f32 %v538, %v546
        %v549 = vpack.c.bf16 %v548, %v547
        %v550 = vld [vmem:[%s6] sm:$0xf]
        %v551 = vld [vmem:[%s6 + $0x4] sm:$0xf]
        %v552 = vld [vmem:[%s6 + $0x8] sm:$0xf]
        %v553 = vld [vmem:[%s6 + $0xc] sm:$0xf]
        %v558 = vunpack.c.l.b16 %v550
        %v559 = vunpack.c.l.b16 %v551
        %v560 = vunpack.c.l.b16 %v552
        %v561 = vunpack.c.l.b16 %v553
        %v562 = vpack.c.b16 %v559, %v558
        %v563 = vpack.c.b16 %v561, %v560
        %v567 = vsel %vm329, %v549, 0
        %569 = vmatprep.subr.bf16.mxu0 0
        %570 = vmatpush1.bf16.msra.mxu0 %v562
        %571 = vmatprep.subr.bf16.mxu0 0
        %572 = vmatpush1.bf16.msra.mxu0 %v563
        %573 = vmatprep.subr.bf16.mxu0 0
        %574 = vmatpush1.bf16.msra.mxu0 0
        %575 = vmatprep.subr.bf16.mxu0 0
        %576 = vmatpush1.bf16.msra.mxu0 0
        %577 = vmatprep.subr.bf16.mxu0 0
        %578 = vmatpush1.bf16.msra.mxu0 0
        %579 = vmatprep.subr.bf16.mxu0 0
        %580 = vmatpush1.bf16.msra.mxu0 0
        %581 = vmatprep.subr.bf16.mxu0 0
        %582 = vmatpush1.bf16.msra.mxu0 0
        %583 = vmatprep.subr.bf16.mxu0 0
        %584 = vmatpush1.bf16.msra.mxu0 0
        %585 = vmatprep.subr.bf16.mxu0 0
        %586 = vmatpush1.bf16.msra.mxu0 0
        %587 = vmatprep.subr.bf16.mxu0 0
        %588 = vmatpush1.bf16.msra.mxu0 0
        %589 = vmatprep.subr.bf16.mxu0 0
        %590 = vmatpush1.bf16.msra.mxu0 0
        %591 = vmatprep.subr.bf16.mxu0 0
        %592 = vmatpush1.bf16.msra.mxu0 0
        %593 = vmatprep.subr.bf16.mxu0 0
        %594 = vmatpush1.bf16.msra.mxu0 0
        %595 = vmatprep.subr.bf16.mxu0 0
        %596 = vmatpush1.bf16.msra.mxu0 0
        %597 = vmatprep.subr.bf16.mxu0 0
        %598 = vmatpush1.bf16.msra.mxu0 0
        %599 = vmatprep.subr.bf16.mxu0 0
        %600 = vmatpush1.bf16.msra.mxu0 0
        %601 = vmatprep.mubr.bf16.mxu0 0
        %602 = vmatmul.mubr.bf16.gmra.mrb[0].mxu0 %v567
        %v603 = vpop.f32.mrb[0].mxu0
        %v604 = vadd.f32 0.0, %v603
        %v605 = vpop.f32.mrb[0].mxu0
        %v606 = vpop.f32.mrb[0].mxu0
        %v607 = vadd.f32 0.0, %v606
        %v608 = vpop.f32.mrb[0].mxu0
        %609 = vdwg.mxu0
        %610 = vst.msk [vmem:[%s323] sm:$0xff] %vm329, %v604
        %611 = vst.msk [vmem:[%s323 + $0x8] sm:$0xff] %vm329, %v607
        %s612 = sand.u32 %s185, 1
        %s613 = scalar_lea.sflag [#allocation4], %s612
        %s614 = sand.u32 %s185, 1
        %s615 = smul.addr %s614, 16
        %s616 = scalar_lea.vmem [#allocation8], %s615
        // Predicated region
        $region61: #{tpu_custom_call.1} parent=47 // pred_check
          %p617 = pneg %p195
        $region62: #{tpu_custom_call.1} parent=47 // pred_check_branch
          %619 = sbr.rel (%p617) target = $region64
        $region63: #{tpu_custom_call.1} parent=47 // pred_region
          %s620 = smul.u32 2, %s25
          %s622 = ssub.s32 256, 256
          %623 = vsyncadd %s613, %s622
          %s624 = smul.addr %s620, 128
          %s625 = scalar_lea.hbm %s7, %s624
          %s626 = sshll.u32 %s616, 4
          %s627 = int_to_ptr.vmem [resolvable:$true] %s626
          %632 = dma.vmem_to_hbm [thread:$0]  %s627, 256, %s625, %s613, 128, 128, 8
        $region64: #{tpu_custom_call.1} parent=47 // pred_fallthru
          _
      $region48: #{tpu_custom_call.1} parent=5 // pred_fallthru
        _
      %p633 = scmp.le.s32.totalorder 2, %s20
      // Predicated region
      $region65: #{tpu_custom_call.1} parent=5 // pred_check
        %p634 = pneg %p633
      $region66: #{tpu_custom_call.1} parent=5 // pred_check_branch
        %636 = sbr.rel (%p634) target = $region68
      $region67: #{tpu_custom_call.1} parent=5 // pred_region
        %s637 = ssub.s32 %s20, 2
        // Predicated region
        $region69: #{tpu_custom_call.1} parent=67 // pred_check
          %p638 = pneg %p201
        $region70: #{tpu_custom_call.1} parent=67 // pred_check_branch
          %640 = sbr.rel (%p638) target = $region72
        $region71: #{tpu_custom_call.1} parent=67 // pred_region
          %s641 = sand.u32 %s186, 1
          %s642 = scalar_lea.sflag [#allocation4], %s641
          %s643 = sand.u32 %s186, 1
          %s644 = smul.addr %s643, 16
          %s645 = scalar_lea.vmem [#allocation8], %s644
          %646 = dma.done %s642, 256
        $region72: #{tpu_custom_call.1} parent=67 // pred_fallthru
          _
      $region68: #{tpu_custom_call.1} parent=5 // pred_fallthru
        _
    $region6: #{tpu_custom_call.1} parent=1 // loop_footer
      %s24 = sadd.s32 1, %s20
    $region7: #{tpu_custom_call.1} parent=1 // loop_footer_branch
      %19 = sbr.rel target = $region3
    $region8: #{tpu_custom_call.1} parent=1 // loop_exit
      _
    %647 = vsyncpa [#allocation3], 1
    %s648 = scalar_lea.sflag [#allocation3], 1
    %649 = vsyncpa %s648, 1
    %650 = vsyncpa [#allocation6], 1
    %651 = vsyncpa [#allocation4], 1
    %s652 = scalar_lea.sflag [#allocation4], 1
    %653 = vsyncpa %s652, 1

</llo_original>
